<compile_context>
chip_gen: v7x
topology: tpu7x:2x2x1
jax: 0.10.0
libtpu: 0.0.40
codegen_flags: <defaults>
</compile_context>

<pallas_src>
import jax
import jax.numpy as jnp
from jax.experimental import pallas as pl
from jax.experimental.pallas import tpu as pltpu


def _round_up(x: int, m: int) -> int:
    return ((x + m - 1) // m) * m


def _noise_gen_kernel(lf_ref, nc_ref, w_lf_ref, w_nc_ref, bias_ref, out_ref):
    # Per grid step (F = fold factor, D = latent_dim * F, C = n_cls * F):
    #   lf_ref:   (tb, D)   folded latent tile (f32 or bf16 input)
    #   nc_ref:   (tb, C)   folded node_cls tile (f32)
    #   w_lf_ref: (D, D)    block-diag W[:, :latent].T, bf16   (VMEM-resident)
    #   w_nc_ref: (C, D)    block-diag W[:, latent:].T, f32    (VMEM-resident)
    #   bias_ref: (1, D)    fold-tiled bias, f32               (VMEM-resident)
    #   out_ref:  (tb, D)
    acc = jnp.dot(lf_ref[...].astype(jnp.bfloat16), w_lf_ref[...],
                  preferred_element_type=jnp.float32)
    acc = acc + jnp.dot(nc_ref[...].astype(jnp.float32), w_nc_ref[...],
                        preferred_element_type=jnp.float32)
    acc = acc + bias_ref[...]
    out_ref[...] = acc.astype(out_ref.dtype)


def prepare_noise_generator_params(weight, bias, *, fold: int = 8):
    """One-time parameter prep (hoisted out of the per-call forward).

    weight: (latent_dim, latent_dim + n_cls)  -- PyTorch nn.Linear layout.
    bias:   (latent_dim,)
    fold:   batch rows folded into the lane axis (8 -> 256 lanes for v6e/v7x;
            4 -> 128 lanes exactly fills v5e's MXU).  Any value works anywhere.
    """
    latent_dim = weight.shape[0]
    w_lf = jnp.asarray(weight[:, :latent_dim], jnp.float32).T   # (latent, latent)
    w_nc = jnp.asarray(weight[:, latent_dim:], jnp.float32).T   # (n_cls, latent)
    eye = jnp.eye(fold, dtype=jnp.float32)
    # Block-diagonal weights so one lane-dense matmul handles `fold` batch rows.
    w_lf_bd = jnp.kron(eye, w_lf).astype(jnp.bfloat16)          # (latent*F, latent*F)
    w_nc_bd = jnp.kron(eye, w_nc)                               # (n_cls*F,  latent*F) f32
    bias_t = jnp.tile(jnp.asarray(bias, jnp.float32).reshape(1, latent_dim),
                      (1, fold))                                # (1, latent*F)
    return w_lf_bd, w_nc_bd, bias_t


def noise_generator_forward(latent_features, node_cls, w_lf_bd, w_nc_bd, bias_t, *,
                            block_rows: int = 1024):
    """y = concat([latent_features, node_cls], 1) @ W^T + bias, via Pallas.

    block_rows is in FOLDED rows (each folded row = `fold` batch rows).
    """
    B, latent_dim = latent_features.shape
    n_cls = node_cls.shape[1]
    D = w_lf_bd.shape[1]
    fold = D // latent_dim
    assert w_lf_bd.shape == (D, D)
    assert w_nc_bd.shape == (n_cls * fold, D)
    assert bias_t.shape == (1, D)
    out_dtype = latent_features.dtype

    # Pad only to the fold granularity (a handful of rows, skipped when aligned)
    # -- NOT to a multiple of the batch tile; the partial tail grid block is
    # handled by Pallas boundary masking.
    b_pad = _round_up(B, fold)
    if b_pad != B:
        pad = b_pad - B
        latent_features = jnp.pad(latent_features, ((0, pad), (0, 0)))
        node_cls = jnp.pad(node_cls, ((0, pad), (0, 0)))

    rows = b_pad // fold
    # Free row-major views: fold `fold` batch rows into the lane axis.
    lf_f = latent_features.reshape(rows, latent_dim * fold)
    nc_f = node_cls.reshape(rows, n_cls * fold)

    # Batch tile (folded rows): one tile if everything fits, else a multiple of 8
    # (sublane) with a masked partial tail block.
    if rows <= block_rows:
        tb = rows
    else:
        tb = _round_up(block_rows, 8)
    grid = (pl.cdiv(rows, tb),)

    out_f = pl.pallas_call(
        _noise_gen_kernel,
        out_shape=jax.ShapeDtypeStruct((rows, D), out_dtype),
        grid=grid,
        in_specs=[
            pl.BlockSpec((tb, D), lambda i: (i, 0)),              # lf tile
            pl.BlockSpec((tb, n_cls * fold), lambda i: (i, 0)),   # nc tile
            pl.BlockSpec((D, D), lambda i: (0, 0)),               # W_lf block-diag (resident)
            pl.BlockSpec((n_cls * fold, D), lambda i: (0, 0)),    # W_nc block-diag (resident)
            pl.BlockSpec((1, D), lambda i: (0, 0)),               # bias (resident)
        ],
        out_specs=pl.BlockSpec((tb, D), lambda i: (i, 0)),
        compiler_params=pltpu.CompilerParams(
            # Batch tiles are independent -> shard across v7x's 2 TensorCores.
            dimension_semantics=("parallel",)),
    )(lf_f, nc_f, w_lf_bd, w_nc_bd, bias_t)

    out = out_f.reshape(b_pad, latent_dim)
    return out[:B] if b_pad != B else out


if __name__ == "__main__":
    latent_dim, n_cls = 32, 4
    key = jax.random.PRNGKey(0)
    k1, k2, k3, k4, k5 = jax.random.split(key, 5)

    B = 256
    latent_features = jax.random.normal(k1, (B, latent_dim), dtype=jnp.float32)
    # node_cls is a class indicator (one-hot), as in the surrounding model.
    node_cls = jax.nn.one_hot(
        jax.random.randint(k2, (B,), 0, n_cls), n_cls, dtype=jnp.float32)

    # --- 1) Module init semantics: zero weight & bias -> output == 0.
    weight0 = jnp.zeros((latent_dim, latent_dim + n_cls), dtype=jnp.float32)
    bias0 = jnp.zeros((latent_dim,), dtype=jnp.float32)
    p0 = prepare_noise_generator_params(weight0, bias0, fold=8)
    out0 = jax.block_until_ready(
        noise_generator_forward(latent_features, node_cls, *p0))
    assert out0.shape == (B, latent_dim)
    assert jnp.allclose(out0, jnp.zeros_like(out0), atol=1e-6)

    # --- 2) Random weights: exercises the folded block-diagonal matmul path.
    weight = jax.random.normal(k3, (latent_dim, latent_dim + n_cls), dtype=jnp.float32)
    bias = jax.random.normal(k4, (latent_dim,), dtype=jnp.float32)
    params = prepare_noise_generator_params(weight, bias, fold=8)
    out = jax.block_until_ready(
        noise_generator_forward(latent_features, node_cls, *params))

    # Reference matching the kernel's numerics: bf16 MXU operands (f32 accumulate)
    # for the latent term; f32 for the n_cls term (exact for one-hot) and bias.
    lf_bf = latent_features.astype(jnp.bfloat16).astype(jnp.float32)
    w_lf_bf = weight[:, :latent_dim].T.astype(jnp.bfloat16).astype(jnp.float32)
    ref = (jnp.dot(lf_bf, w_lf_bf, precision=jax.lax.Precision.HIGHEST)
           + jnp.dot(node_cls, weight[:, latent_dim:].T,
                     precision=jax.lax.Precision.HIGHEST)
           + bias)
    assert out.shape == (B, latent_dim)
    assert jnp.allclose(out, ref, atol=1e-4, rtol=1e-4), "mismatch vs reference"

    # --- 3) Unaligned B + multi-step grid with a partial tail tile
    #        (fold-granularity pad + Pallas boundary masking).
    B2 = 100
    lf2 = jax.random.normal(k5, (B2, latent_dim), dtype=jnp.float32)
    nc2 = jax.nn.one_hot(
        jax.random.randint(k2, (B2,), 0, n_cls), n_cls, dtype=jnp.float32)
    out2 = jax.block_until_ready(
        noise_generator_forward(lf2, nc2, *params, block_rows=8))
    lf2_bf = lf2.astype(jnp.bfloat16).astype(jnp.float32)
    ref2 = (jnp.dot(lf2_bf, w_lf_bf, precision=jax.lax.Precision.HIGHEST)
            + jnp.dot(nc2, weight[:, latent_dim:].T,
                      precision=jax.lax.Precision.HIGHEST)
            + bias)
    assert out2.shape == (B2, latent_dim)
    assert jnp.allclose(out2, ref2, atol=1e-4, rtol=1e-4), "mismatch (unaligned B)"

    print("KERNEL_OK")
</pallas_src>

<mosaic_0001>
module attributes {stable_mosaic.version = 11 : i64} {
  func.func @_noise_gen_kernel(%arg0: i32, %arg1: memref<32x256xf32, #tpu.memory_space<vmem>>, %arg2: memref<32x32xf32, #tpu.memory_space<vmem>>, %arg3: memref<256x256xbf16, #tpu.memory_space<vmem>>, %arg4: memref<32x256xf32, #tpu.memory_space<vmem>>, %arg5: memref<1x256xf32, #tpu.memory_space<vmem>>, %arg6: memref<32x256xf32, #tpu.memory_space<vmem>>) attributes {dimension_semantics = [#tpu.dimension_semantics<parallel>], iteration_bounds = array<i64: 1>, scalar_prefetch = 0 : i64, scratch_operands = 0 : i64, tpu.core_type = #tpu.core_type<tc>, window_params = [{transform_indices = @transform_0, window_bounds = array<i64: 32, 256>}, {transform_indices = @transform_1, window_bounds = array<i64: 32, 32>}, {pipeline_mode = #tpu.pipeline_mode<synchronous>, transform_indices = @transform_2, window_bounds = array<i64: 256, 256>}, {pipeline_mode = #tpu.pipeline_mode<synchronous>, transform_indices = @transform_3, window_bounds = array<i64: 32, 256>}, {pipeline_mode = #tpu.pipeline_mode<synchronous>, transform_indices = @transform_4, window_bounds = array<i64: 1, 256>}, {transform_indices = @transform_5, window_bounds = array<i64: 32, 256>}]} {
    %c0 = arith.constant 0 : index
    %c0_0 = arith.constant 0 : index
    %0 = vector.load %arg1[%c0, %c0_0] : memref<32x256xf32, #tpu.memory_space<vmem>>, vector<32x256xf32>
    %1 = arith.truncf %0 : vector<32x256xf32> to vector<32x256xbf16>
    %c0_1 = arith.constant 0 : index
    %c0_2 = arith.constant 0 : index
    %2 = vector.load %arg3[%c0_1, %c0_2] : memref<256x256xbf16, #tpu.memory_space<vmem>>, vector<256x256xbf16>
    %cst = arith.constant dense<0.000000e+00> : vector<32x256xf32>
    %3 = tpu.matmul %1, %2, %cst {dimension_numbers = #tpu.dot_dimension_numbers<[1], [0], [0], [1], [0, 0, 1, 1], [], []>} : vector<32x256xbf16>, vector<256x256xbf16>, vector<32x256xf32> -> vector<32x256xf32>
    %c0_3 = arith.constant 0 : index
    %c0_4 = arith.constant 0 : index
    %4 = vector.load %arg2[%c0_3, %c0_4] : memref<32x32xf32, #tpu.memory_space<vmem>>, vector<32x32xf32>
    %c0_5 = arith.constant 0 : index
    %c0_6 = arith.constant 0 : index
    %5 = vector.load %arg4[%c0_5, %c0_6] : memref<32x256xf32, #tpu.memory_space<vmem>>, vector<32x256xf32>
    %cst_7 = arith.constant dense<0.000000e+00> : vector<32x256xf32>
    %6 = tpu.matmul %4, %5, %cst_7 {dimension_numbers = #tpu.dot_dimension_numbers<[1], [0], [0], [1], [0, 0, 1, 1], [], []>} : vector<32x32xf32>, vector<32x256xf32>, vector<32x256xf32> -> vector<32x256xf32>
    %7 = arith.addf %3, %6 : vector<32x256xf32>
    %c0_8 = arith.constant 0 : index
    %c0_9 = arith.constant 0 : index
    %8 = vector.load %arg5[%c0_8, %c0_9] : memref<1x256xf32, #tpu.memory_space<vmem>>, vector<1x256xf32>
    %9 = vector.broadcast %8 : vector<1x256xf32> to vector<32x256xf32>
    %10 = arith.addf %7, %9 : vector<32x256xf32>
    %c0_10 = arith.constant 0 : index
    %c0_11 = arith.constant 0 : index
    %11 = vector.load %arg6[%c0_10, %c0_11] : memref<32x256xf32, #tpu.memory_space<vmem>>, vector<32x256xf32>
    tpu.vector_store %arg6[%c0_10, %c0_11], %10 {strides = array<i32>} : memref<32x256xf32, #tpu.memory_space<vmem>>, vector<32x256xf32>,
    return
  }
  func.func @transform_0(%arg0: i32) -> (i32, i32) {
    %c0_i32 = arith.constant 0 : i32
    %c0_i32_0 = arith.constant 0 : i32
    return %arg0, %c0_i32 : i32, i32
  }
  func.func @transform_1(%arg0: i32) -> (i32, i32) {
    %c0_i32 = arith.constant 0 : i32
    %c0_i32_0 = arith.constant 0 : i32
    return %arg0, %c0_i32 : i32, i32
  }
  func.func @transform_2(%arg0: i32) -> (i32, i32) {
    %c0_i32 = arith.constant 0 : i32
    %c0_i32_0 = arith.constant 0 : i32
    %c0_i32_1 = arith.constant 0 : i32
    return %c0_i32, %c0_i32_0 : i32, i32
  }
  func.func @transform_3(%arg0: i32) -> (i32, i32) {
    %c0_i32 = arith.constant 0 : i32
    %c0_i32_0 = arith.constant 0 : i32
    %c0_i32_1 = arith.constant 0 : i32
    return %c0_i32, %c0_i32_0 : i32, i32
  }
  func.func @transform_4(%arg0: i32) -> (i32, i32) {
    %c0_i32 = arith.constant 0 : i32
    %c0_i32_0 = arith.constant 0 : i32
    %c0_i32_1 = arith.constant 0 : i32
    return %c0_i32, %c0_i32_0 : i32, i32
  }
  func.func @transform_5(%arg0: i32) -> (i32, i32) {
    %c0_i32 = arith.constant 0 : i32
    %c0_i32_0 = arith.constant 0 : i32
    return %arg0, %c0_i32 : i32, i32
  }
}

</mosaic_0001>

<llo_original>
// kernel: tpu_custom_call.1
$region0: #{tpu_custom_call.1}
  #allocation0 [shape = 'u32[]', space=smem, size = 0x4, offset = 0x4, fixed_abs, tag = 'smem constant byte address 0x4 - core index']
  #allocation1 [shape = 'u32[144,128]{1,0:T(1,128)}', space=vmem, size = 0x12000, scoped, tag = 'internal scratch']
  %s0 = inlined_call_operand.hbm [shape: f32[32,256], index: 0, kind: input, shape index: {}]
  %s1 = inlined_call_operand.hbm [shape: f32[32,32], index: 1, kind: input, shape index: {}]
  %s2 = inlined_call_operand.hbm [shape: bf16[256,256], index: 2, kind: input, shape index: {}]
  %s3 = inlined_call_operand.hbm [shape: f32[32,256], index: 3, kind: input, shape index: {}]
  %s4 = inlined_call_operand.vmem [shape: f32[1,256], index: 4, kind: input, shape index: {}]
  %s5 = inlined_call_operand.hbm [shape: f32[32,256], index: 5, kind: output, shape index: {}]
  %s6 = sld [smem:[#allocation0]]
  $region46: #{tpu_custom_call.1} parent=0
    _
  %s8 = ssub.s32 1, %s6
  %s9 = scalar_select 0, %s8, %s6
  $region1: #{tpu_custom_call.1} parent=0
    #allocation2 [shape = 'u8[32768]{0}', space=vmem, size = 0x8000, scoped, tag = 'input window, operand 0, single buffered']
    #allocation3 [shape = 's32[1]{0}', space=sflag, size = 0x4, scoped, tag = 'scoped memory for tpu_custom_call.1']
    #allocation4 [shape = 's32[1]{0}', space=sflag, size = 0x4, scoped, tag = 'scoped memory for tpu_custom_call.1']
    #allocation5 [shape = 'u8[16384]{0}', space=vmem, size = 0x4000, scoped, tag = 'input window, operand 1, single buffered']
    #allocation6 [shape = 's32[1]{0}', space=sflag, size = 0x4, scoped, tag = 'scoped memory for tpu_custom_call.1']
    #allocation7 [shape = 'u8[131072]{0}', space=vmem, size = 0x20000, scoped, tag = 'input window, operand 2, single buffered']
    #allocation8 [shape = 'u8[32768]{0}', space=vmem, size = 0x8000, scoped, tag = 'input window, operand 3, single buffered']
    #allocation9 [shape = 's32[1]{0}', space=sflag, size = 0x4, scoped, tag = 'scoped memory for tpu_custom_call.1']
    #allocation10 [shape = 'u8[32768]{0}', space=vmem, size = 0x8000, scoped, tag = 'output window, operand 0, single buffered']
    %10 = vsyncpa [#allocation3], 0
    %11 = vsyncpa [#allocation6], 0
    %12 = vsyncpa [#allocation9], 0
    %13 = vsyncpa [#allocation4], 0
    // Predicated region
    $region2: #{tpu_custom_call.1} parent=1 // pred_check
      _
    $region3: #{tpu_custom_call.1} parent=1 // pred_check_branch
      %15 = sbr.rel (0) target = $region5
    $region4: #{tpu_custom_call.1} parent=1 // pred_region
      %s17 = ssub.s32 1024, 1024
      %18 = vsyncadd [#allocation3], %s17
      %s19 = sshll.u32 [#allocation2], 4
      %s20 = int_to_ptr.vmem [resolvable:$true] %s19
      %25 = dma.hbm_to_vmem [thread:$0]  %s0, 1024, %s20, [#allocation3], 256, 256, 16
    $region5: #{tpu_custom_call.1} parent=1 // pred_fallthru
      _
    // Predicated region
    $region6: #{tpu_custom_call.1} parent=1 // pred_check
      _
    $region7: #{tpu_custom_call.1} parent=1 // pred_check_branch
      %27 = sbr.rel (0) target = $region9
    $region8: #{tpu_custom_call.1} parent=1 // pred_region
      %s29 = ssub.s32 512, 512
      %30 = vsyncadd [#allocation6], %s29
      %s31 = sshll.u32 [#allocation5], 4
      %s32 = int_to_ptr.vmem [resolvable:$true] %s31
      %37 = dma.hbm_to_vmem [thread:$0]  %s1, 512, %s32, [#allocation6], 128, 128, 8
    $region9: #{tpu_custom_call.1} parent=1 // pred_fallthru
      _
    // Predicated region
    $region10: #{tpu_custom_call.1} parent=1 // pred_check
      _
    $region11: #{tpu_custom_call.1} parent=1 // pred_check_branch
      %39 = sbr.rel (0) target = $region13
    $region12: #{tpu_custom_call.1} parent=1 // pred_region
      %s41 = ssub.s32 4096, 4096
      %42 = vsyncadd [#allocation6], %s41
      %s43 = sshll.u32 [#allocation7], 4
      %s44 = int_to_ptr.vmem [resolvable:$true] %s43
      %49 = dma.hbm_to_vmem [thread:$0]  %s2, 4096, %s44, [#allocation6], 128, 128, 8
    $region13: #{tpu_custom_call.1} parent=1 // pred_fallthru
      _
    // Predicated region
    $region14: #{tpu_custom_call.1} parent=1 // pred_check
      _
    $region15: #{tpu_custom_call.1} parent=1 // pred_check_branch
      %51 = sbr.rel (0) target = $region17
    $region16: #{tpu_custom_call.1} parent=1 // pred_region
      %s53 = ssub.s32 1024, 1024
      %54 = vsyncadd [#allocation9], %s53
      %s55 = sshll.u32 [#allocation8], 4
      %s56 = int_to_ptr.vmem [resolvable:$true] %s55
      %61 = dma.hbm_to_vmem [thread:$0]  %s3, 1024, %s56, [#allocation9], 256, 256, 16
    $region17: #{tpu_custom_call.1} parent=1 // pred_fallthru
      _
    // Predicated region
    $region18: #{tpu_custom_call.1} parent=1 // pred_check
      _
    $region19: #{tpu_custom_call.1} parent=1 // pred_check_branch
      %63 = sbr.rel (0) target = $region21
    $region20: #{tpu_custom_call.1} parent=1 // pred_region
      _
    $region21: #{tpu_custom_call.1} parent=1 // pred_fallthru
      _
    // Predicated region
    $region22: #{tpu_custom_call.1} parent=1 // pred_check
      _
    $region23: #{tpu_custom_call.1} parent=1 // pred_check_branch
      %65 = sbr.rel (0) target = $region25
    $region24: #{tpu_custom_call.1} parent=1 // pred_region
      %66 = dma.done [#allocation3], 1024
    $region25: #{tpu_custom_call.1} parent=1 // pred_fallthru
      _
    // Predicated region
    $region26: #{tpu_custom_call.1} parent=1 // pred_check
      _
    $region27: #{tpu_custom_call.1} parent=1 // pred_check_branch
      %68 = sbr.rel (0) target = $region29
    $region28: #{tpu_custom_call.1} parent=1 // pred_region
      %69 = dma.done [#allocation6], 512
    $region29: #{tpu_custom_call.1} parent=1 // pred_fallthru
      _
    // Predicated region
    $region30: #{tpu_custom_call.1} parent=1 // pred_check
      _
    $region31: #{tpu_custom_call.1} parent=1 // pred_check_branch
      %71 = sbr.rel (0) target = $region33
    $region32: #{tpu_custom_call.1} parent=1 // pred_region
      %72 = dma.done [#allocation6], 4096
    $region33: #{tpu_custom_call.1} parent=1 // pred_fallthru
      _
    // Predicated region
    $region34: #{tpu_custom_call.1} parent=1 // pred_check
      _
    $region35: #{tpu_custom_call.1} parent=1 // pred_check_branch
      %74 = sbr.rel (0) target = $region37
    $region36: #{tpu_custom_call.1} parent=1 // pred_region
      %75 = dma.done [#allocation9], 1024
    $region37: #{tpu_custom_call.1} parent=1 // pred_fallthru
      _
    %v76 = vld [vmem:[#allocation2] sm:$0xff]
    %v77 = vld [vmem:[#allocation2 + $0x8] sm:$0xff]
    %v78 = vld [vmem:[#allocation2 + $0x10] sm:$0xff]
    %v79 = vld [vmem:[#allocation2 + $0x18] sm:$0xff]
    %v80 = vld [vmem:[#allocation2 + $0x20] sm:$0xff]
    %v81 = vld [vmem:[#allocation2 + $0x28] sm:$0xff]
    %v82 = vld [vmem:[#allocation2 + $0x30] sm:$0xff]
    %v83 = vld [vmem:[#allocation2 + $0x38] sm:$0xff]
    %v84 = vpack.c.bf16 %v78, %v76
    %v85 = vpack.c.bf16 %v79, %v77
    %v86 = vpack.c.bf16 %v82, %v80
    %v87 = vpack.c.bf16 %v83, %v81
    %v88 = vld [vmem:[#allocation7] sm:$0xff]
    %v89 = vld [vmem:[#allocation7 + $0x8] sm:$0xff]
    %v90 = vld [vmem:[#allocation7 + $0x10] sm:$0xff]
    %v91 = vld [vmem:[#allocation7 + $0x18] sm:$0xff]
    %v92 = vld [vmem:[#allocation7 + $0x20] sm:$0xff]
    %v93 = vld [vmem:[#allocation7 + $0x28] sm:$0xff]
    %v94 = vld [vmem:[#allocation7 + $0x30] sm:$0xff]
    %v95 = vld [vmem:[#allocation7 + $0x38] sm:$0xff]
    %v96 = vld [vmem:[#allocation7 + $0x40] sm:$0xff]
    %v97 = vld [vmem:[#allocation7 + $0x48] sm:$0xff]
    %v98 = vld [vmem:[#allocation7 + $0x50] sm:$0xff]
    %v99 = vld [vmem:[#allocation7 + $0x58] sm:$0xff]
    %v100 = vld [vmem:[#allocation7 + $0x60] sm:$0xff]
    %v101 = vld [vmem:[#allocation7 + $0x68] sm:$0xff]
    %v102 = vld [vmem:[#allocation7 + $0x70] sm:$0xff]
    %v103 = vld [vmem:[#allocation7 + $0x78] sm:$0xff]
    %v104 = vld [vmem:[#allocation7 + $0x80] sm:$0xff]
    %v105 = vld [vmem:[#allocation7 + $0x88] sm:$0xff]
    %v106 = vld [vmem:[#allocation7 + $0x90] sm:$0xff]
    %v107 = vld [vmem:[#allocation7 + $0x98] sm:$0xff]
    %v108 = vld [vmem:[#allocation7 + $0xa0] sm:$0xff]
    %v109 = vld [vmem:[#allocation7 + $0xa8] sm:$0xff]
    %v110 = vld [vmem:[#allocation7 + $0xb0] sm:$0xff]
    %v111 = vld [vmem:[#allocation7 + $0xb8] sm:$0xff]
    %v112 = vld [vmem:[#allocation7 + $0xc0] sm:$0xff]
    %v113 = vld [vmem:[#allocation7 + $0xc8] sm:$0xff]
    %v114 = vld [vmem:[#allocation7 + $0xd0] sm:$0xff]
    %v115 = vld [vmem:[#allocation7 + $0xd8] sm:$0xff]
    %v116 = vld [vmem:[#allocation7 + $0xe0] sm:$0xff]
    %v117 = vld [vmem:[#allocation7 + $0xe8] sm:$0xff]
    %v118 = vld [vmem:[#allocation7 + $0xf0] sm:$0xff]
    %v119 = vld [vmem:[#allocation7 + $0xf8] sm:$0xff]
    %v120 = vld [vmem:[#allocation5] sm:$0xff]
    %v121 = vld [vmem:[#allocation5 + $0x8] sm:$0xff]
    %v122 = vld [vmem:[#allocation5 + $0x10] sm:$0xff]
    %v123 = vld [vmem:[#allocation5 + $0x18] sm:$0xff]
    %v124 = vld [vmem:[#allocation8] sm:$0xff]
    %v125 = vld [vmem:[#allocation8 + $0x8] sm:$0xff]
    %v126 = vld [vmem:[#allocation8 + $0x10] sm:$0xff]
    %v127 = vld [vmem:[#allocation8 + $0x18] sm:$0xff]
    %v128 = vld [vmem:[#allocation8 + $0x20] sm:$0xff]
    %v129 = vld [vmem:[#allocation8 + $0x28] sm:$0xff]
    %v130 = vld [vmem:[#allocation8 + $0x30] sm:$0xff]
    %v131 = vld [vmem:[#allocation8 + $0x38] sm:$0xff]
    %vm132 = vcmask 261120
    %v134 = vsel %vm132, %v120, 0
    %v137 = vsel %vm132, %v121, 0
    %v140 = vsel %vm132, %v122, 0
    %v143 = vsel %vm132, %v123, 0
    %145 = vmatprep.subr.mxu0 %v125
    %146 = vmatpush1.msra.mxu0 %v124
    %147 = vmatprep.subr.mxu0 %v127
    %148 = vmatpush1.msra.mxu0 %v126
    %149 = vmatprep.subr.mxu0 %v129
    %150 = vmatpush1.msra.mxu0 %v128
    %151 = vmatprep.subr.mxu0 %v131
    %152 = vmatpush1.msra.mxu0 %v130
    %153 = vmatprep.subr.mxu0 0.0
    %154 = vmatpush1.msra.mxu0 0.0
    %155 = vmatprep.subr.mxu0 0.0
    %156 = vmatpush1.msra.mxu0 0.0
    %157 = vmatprep.subr.mxu0 0.0
    %158 = vmatpush1.msra.mxu0 0.0
    %159 = vmatprep.subr.mxu0 0.0
    %160 = vmatpush1.msra.mxu0 0.0
    %161 = vmatprep.subr.mxu0 0.0
    %162 = vmatpush1.msra.mxu0 0.0
    %163 = vmatprep.subr.mxu0 0.0
    %164 = vmatpush1.msra.mxu0 0.0
    %165 = vmatprep.subr.mxu0 0.0
    %166 = vmatpush1.msra.mxu0 0.0
    %167 = vmatprep.subr.mxu0 0.0
    %168 = vmatpush1.msra.mxu0 0.0
    %169 = vmatprep.subr.mxu0 0.0
    %170 = vmatpush1.msra.mxu0 0.0
    %171 = vmatprep.subr.mxu0 0.0
    %172 = vmatpush1.msra.mxu0 0.0
    %173 = vmatprep.subr.mxu0 0.0
    %174 = vmatpush1.msra.mxu0 0.0
    %175 = vmatprep.subr.mxu0 0.0
    %176 = vmatpush1.msra.mxu0 0.0
    %177 = vmatprep.subr.mxu0 0.0
    %178 = vmatpush1.msra.mxu0 0.0
    %179 = vmatprep.subr.mxu0 0.0
    %180 = vmatpush1.msra.mxu0 0.0
    %181 = vmatprep.subr.mxu0 0.0
    %182 = vmatpush1.msra.mxu0 0.0
    %183 = vmatprep.subr.mxu0 0.0
    %184 = vmatpush1.msra.mxu0 0.0
    %185 = vmatprep.subr.mxu0 0.0
    %186 = vmatpush1.msra.mxu0 0.0
    %187 = vmatprep.subr.mxu0 0.0
    %188 = vmatpush1.msra.mxu0 0.0
    %189 = vmatprep.subr.mxu0 0.0
    %190 = vmatpush1.msra.mxu0 0.0
    %191 = vmatprep.subr.mxu0 0.0
    %192 = vmatpush1.msra.mxu0 0.0
    %193 = vmatprep.subr.mxu0 0.0
    %194 = vmatpush1.msra.mxu0 0.0
    %195 = vmatprep.subr.mxu0 0.0
    %196 = vmatpush1.msra.mxu0 0.0
    %197 = vmatprep.subr.mxu0 0.0
    %198 = vmatpush1.msra.mxu0 0.0
    %199 = vmatprep.subr.mxu0 0.0
    %200 = vmatpush1.msra.mxu0 0.0
    %201 = vmatprep.subr.mxu0 0.0
    %202 = vmatpush1.msra.mxu0 0.0
    %203 = vmatprep.subr.mxu0 0.0
    %204 = vmatpush1.msra.mxu0 0.0
    %205 = vmatprep.subr.mxu0 0.0
    %206 = vmatpush1.msra.mxu0 0.0
    %207 = vmatprep.subr.mxu0 0.0
    %208 = vmatpush1.msra.mxu0 0.0
    %209 = vmatprep.mubr.f32.mxu0 0.0
    %210 = vmatmul.mubr.f32.gmra.mrb[0].mxu0 %v134
    %v211 = vpop.f32.mrb[0].mxu0
    %v212 = vadd.f32 0.0, %v211
    %v213 = vpop.f32.mrb[0].mxu0
    %v214 = vadd.f32 0.0, %v213
    %215 = vmatprep.mubr.f32.mxu0 0.0
    %216 = vmatmul.mubr.f32.gmra.mrb[0].mxu0 %v137
    %v217 = vpop.f32.mrb[0].mxu0
    %v218 = vadd.f32 0.0, %v217
    %v219 = vpop.f32.mrb[0].mxu0
    %v220 = vadd.f32 0.0, %v219
    %221 = vmatprep.mubr.f32.mxu0 0.0
    %222 = vmatmul.mubr.f32.gmra.mrb[0].mxu0 %v140
    %v223 = vpop.f32.mrb[0].mxu0
    %v224 = vadd.f32 0.0, %v223
    %v225 = vpop.f32.mrb[0].mxu0
    %v226 = vadd.f32 0.0, %v225
    %227 = vmatprep.mubr.f32.mxu0 0.0
    %228 = vmatmul.mubr.f32.gmra.mrb[0].mxu0 %v143
    %v229 = vpop.f32.mrb[0].mxu0
    %v230 = vadd.f32 0.0, %v229
    %v231 = vpop.f32.mrb[0].mxu0
    %v232 = vadd.f32 0.0, %v231
    %233 = vdwg.mxu0
    %v266 = vunpack.c.l.b16 %v88
    %v267 = vunpack.c.h.b16 %v88
    %v268 = vunpack.c.l.b16 %v89
    %v269 = vunpack.c.h.b16 %v89
    %v270 = vunpack.c.l.b16 %v90
    %v271 = vunpack.c.h.b16 %v90
    %v272 = vunpack.c.l.b16 %v91
    %v273 = vunpack.c.h.b16 %v91
    %v274 = vunpack.c.l.b16 %v92
    %v275 = vunpack.c.h.b16 %v92
    %v276 = vunpack.c.l.b16 %v93
    %v277 = vunpack.c.h.b16 %v93
    %v278 = vunpack.c.l.b16 %v94
    %v279 = vunpack.c.h.b16 %v94
    %v280 = vunpack.c.l.b16 %v95
    %v281 = vunpack.c.h.b16 %v95
    %v282 = vunpack.c.l.b16 %v96
    %v283 = vunpack.c.h.b16 %v96
    %v284 = vunpack.c.l.b16 %v97
    %v285 = vunpack.c.h.b16 %v97
    %v286 = vunpack.c.l.b16 %v98
    %v287 = vunpack.c.h.b16 %v98
    %v288 = vunpack.c.l.b16 %v99
    %v289 = vunpack.c.h.b16 %v99
    %v290 = vunpack.c.l.b16 %v100
    %v291 = vunpack.c.h.b16 %v100
    %v292 = vunpack.c.l.b16 %v101
    %v293 = vunpack.c.h.b16 %v101
    %v294 = vunpack.c.l.b16 %v102
    %v295 = vunpack.c.h.b16 %v102
    %v296 = vunpack.c.l.b16 %v103
    %v297 = vunpack.c.h.b16 %v103
    %v298 = vunpack.c.l.b16 %v104
    %v299 = vunpack.c.h.b16 %v104
    %v300 = vunpack.c.l.b16 %v105
    %v301 = vunpack.c.h.b16 %v105
    %v302 = vunpack.c.l.b16 %v106
    %v303 = vunpack.c.h.b16 %v106
    %v304 = vunpack.c.l.b16 %v107
    %v305 = vunpack.c.h.b16 %v107
    %v306 = vunpack.c.l.b16 %v108
    %v307 = vunpack.c.h.b16 %v108
    %v308 = vunpack.c.l.b16 %v109
    %v309 = vunpack.c.h.b16 %v109
    %v310 = vunpack.c.l.b16 %v110
    %v311 = vunpack.c.h.b16 %v110
    %v312 = vunpack.c.l.b16 %v111
    %v313 = vunpack.c.h.b16 %v111
    %v314 = vunpack.c.l.b16 %v112
    %v315 = vunpack.c.h.b16 %v112
    %v316 = vunpack.c.l.b16 %v113
    %v317 = vunpack.c.h.b16 %v113
    %v318 = vunpack.c.l.b16 %v114
    %v319 = vunpack.c.h.b16 %v114
    %v320 = vunpack.c.l.b16 %v115
    %v321 = vunpack.c.h.b16 %v115
    %v322 = vunpack.c.l.b16 %v116
    %v323 = vunpack.c.h.b16 %v116
    %v324 = vunpack.c.l.b16 %v117
    %v325 = vunpack.c.h.b16 %v117
    %v326 = vunpack.c.l.b16 %v118
    %v327 = vunpack.c.h.b16 %v118
    %v328 = vunpack.c.l.b16 %v119
    %v329 = vunpack.c.h.b16 %v119
    %v330 = vpack.c.b16 %v268, %v266
    %v331 = vpack.c.b16 %v269, %v267
    %v332 = vpack.c.b16 %v272, %v270
    %v333 = vpack.c.b16 %v273, %v271
    %v334 = vpack.c.b16 %v276, %v274
    %v335 = vpack.c.b16 %v277, %v275
    %v336 = vpack.c.b16 %v280, %v278
    %v337 = vpack.c.b16 %v281, %v279
    %v338 = vpack.c.b16 %v284, %v282
    %v339 = vpack.c.b16 %v285, %v283
    %v340 = vpack.c.b16 %v288, %v286
    %v341 = vpack.c.b16 %v289, %v287
    %v342 = vpack.c.b16 %v292, %v290
    %v343 = vpack.c.b16 %v293, %v291
    %v344 = vpack.c.b16 %v296, %v294
    %v345 = vpack.c.b16 %v297, %v295
    %v346 = vpack.c.b16 %v300, %v298
    %v347 = vpack.c.b16 %v301, %v299
    %v348 = vpack.c.b16 %v304, %v302
    %v349 = vpack.c.b16 %v305, %v303
    %v350 = vpack.c.b16 %v308, %v306
    %v351 = vpack.c.b16 %v309, %v307
    %v352 = vpack.c.b16 %v312, %v310
    %v353 = vpack.c.b16 %v313, %v311
    %v354 = vpack.c.b16 %v316, %v314
    %v355 = vpack.c.b16 %v317, %v315
    %v356 = vpack.c.b16 %v320, %v318
    %v357 = vpack.c.b16 %v321, %v319
    %v358 = vpack.c.b16 %v324, %v322
    %v359 = vpack.c.b16 %v325, %v323
    %v360 = vpack.c.b16 %v328, %v326
    %v361 = vpack.c.b16 %v329, %v327
    %394 = vmatprep.subr.bf16.mxu0 %v331
    %395 = vmatpush1.bf16.msra.mxu0 %v330
    %396 = vmatprep.subr.bf16.mxu0 %v333
    %397 = vmatpush1.bf16.msra.mxu0 %v332
    %398 = vmatprep.subr.bf16.mxu0 %v335
    %399 = vmatpush1.bf16.msra.mxu0 %v334
    %400 = vmatprep.subr.bf16.mxu0 %v337
    %401 = vmatpush1.bf16.msra.mxu0 %v336
    %402 = vmatprep.subr.bf16.mxu0 %v339
    %403 = vmatpush1.bf16.msra.mxu0 %v338
    %404 = vmatprep.subr.bf16.mxu0 %v341
    %405 = vmatpush1.bf16.msra.mxu0 %v340
    %406 = vmatprep.subr.bf16.mxu0 %v343
    %407 = vmatpush1.bf16.msra.mxu0 %v342
    %408 = vmatprep.subr.bf16.mxu0 %v345
    %409 = vmatpush1.bf16.msra.mxu0 %v344
    %410 = vmatprep.subr.bf16.mxu0 %v347
    %411 = vmatpush1.bf16.msra.mxu0 %v346
    %412 = vmatprep.subr.bf16.mxu0 %v349
    %413 = vmatpush1.bf16.msra.mxu0 %v348
    %414 = vmatprep.subr.bf16.mxu0 %v351
    %415 = vmatpush1.bf16.msra.mxu0 %v350
    %416 = vmatprep.subr.bf16.mxu0 %v353
    %417 = vmatpush1.bf16.msra.mxu0 %v352
    %418 = vmatprep.subr.bf16.mxu0 %v355
    %419 = vmatpush1.bf16.msra.mxu0 %v354
    %420 = vmatprep.subr.bf16.mxu0 %v357
    %421 = vmatpush1.bf16.msra.mxu0 %v356
    %422 = vmatprep.subr.bf16.mxu0 %v359
    %423 = vmatpush1.bf16.msra.mxu0 %v358
    %424 = vmatprep.subr.bf16.mxu0 %v361
    %425 = vmatpush1.bf16.msra.mxu0 %v360
    %426 = vmatprep.mubr.bf16.mxu0 %v85
    %427 = vmatmul.mubr.bf16.gmra.mrb[0].mxu0 %v84
    %v428 = vpop.f32.mrb[0].mxu0
    %v429 = vadd.f32 %v212, %v428
    %v430 = vpop.f32.mrb[0].mxu0
    %v431 = vadd.f32 %v214, %v430
    %v432 = vpop.f32.mrb[0].mxu0
    %v433 = vadd.f32 %v218, %v432
    %v434 = vpop.f32.mrb[0].mxu0
    %v435 = vadd.f32 %v220, %v434
    %436 = vmatprep.mubr.bf16.mxu0 %v87
    %437 = vmatmul.mubr.bf16.gmra.mrb[0].mxu0 %v86
    %v438 = vpop.f32.mrb[0].mxu0
    %v439 = vadd.f32 %v224, %v438
    %v440 = vpop.f32.mrb[0].mxu0
    %v441 = vadd.f32 %v226, %v440
    %v442 = vpop.f32.mrb[0].mxu0
    %v443 = vadd.f32 %v230, %v442
    %v444 = vpop.f32.mrb[0].mxu0
    %v445 = vadd.f32 %v232, %v444
    %446 = vdwg.mxu0
    %v447 = vld [vmem:[%s4] sm:$0x3]
    %v449 = vlaneseq
    %v450 = vshrl.u32 %v449, 7
    %v451 = vsub.s32 0, %v450
    %v452 = vrot.slane %v447, %v451
    %v453 = vlaneseq
    %v454 = vshrl.u32 %v453, 7
    %v455 = vsub.s32 1, %v454
    %v456 = vrot.slane %v447, %v455
    %v459 = vadd.f32 %v429, %v452
    %v460 = vadd.f32 %v431, %v456
    %v461 = vadd.f32 %v433, %v452
    %v462 = vadd.f32 %v435, %v456
    %v463 = vadd.f32 %v439, %v452
    %v464 = vadd.f32 %v441, %v456
    %v465 = vadd.f32 %v443, %v452
    %v466 = vadd.f32 %v445, %v456
    %467 = vst [vmem:[#allocation10] sm:$0xff] %v459
    %468 = vst [vmem:[#allocation10 + $0x8] sm:$0xff] %v460
    %469 = vst [vmem:[#allocation10 + $0x10] sm:$0xff] %v461
    %470 = vst [vmem:[#allocation10 + $0x18] sm:$0xff] %v462
    %471 = vst [vmem:[#allocation10 + $0x20] sm:$0xff] %v463
    %472 = vst [vmem:[#allocation10 + $0x28] sm:$0xff] %v464
    %473 = vst [vmem:[#allocation10 + $0x30] sm:$0xff] %v465
    %474 = vst [vmem:[#allocation10 + $0x38] sm:$0xff] %v466
    // Predicated region
    $region38: #{tpu_custom_call.1} parent=1 // pred_check
      _
    $region39: #{tpu_custom_call.1} parent=1 // pred_check_branch
      %476 = sbr.rel (0) target = $region41
    $region40: #{tpu_custom_call.1} parent=1 // pred_region
      %s478 = ssub.s32 1024, 1024
      %479 = vsyncadd [#allocation4], %s478
      %s480 = sshll.u32 [#allocation10], 4
      %s481 = int_to_ptr.vmem [resolvable:$true] %s480
      %486 = dma.vmem_to_hbm [thread:$0]  %s481, 1024, %s5, [#allocation4], 256, 256, 16
    $region41: #{tpu_custom_call.1} parent=1 // pred_fallthru
      _
    // Predicated region
    $region42: #{tpu_custom_call.1} parent=1 // pred_check
      _
    $region43: #{tpu_custom_call.1} parent=1 // pred_check_branch
      %488 = sbr.rel (0) target = $region45
    $region44: #{tpu_custom_call.1} parent=1 // pred_region
      %489 = dma.done [#allocation4], 1024
    $region45: #{tpu_custom_call.1} parent=1 // pred_fallthru
      _
    %490 = vsyncpa [#allocation3], 1
    %491 = vsyncpa [#allocation6], 1
    %492 = vsyncpa [#allocation9], 1
    %493 = vsyncpa [#allocation4], 1

</llo_original>
